<compile_context>
chip_gen: v7x
topology: tpu7x:2x2x1
jax: 0.10.0
libtpu: 0.0.40
codegen_flags: <defaults>
</compile_context>

<pallas_src>
import jax
import jax.numpy as jnp
from jax.experimental import pallas as pl
from jax.experimental.pallas import tpu as pltpu

H1, H2, H3 = 20, 30, 30  # hidden sizes from the PyTorch module


def _round_up(x, m):
    return ((x + m - 1) // m) * m


def _qnet_kernel(x_ref,
                 w1_ref, b1_ref,
                 w2_ref, b2_ref,
                 w3_ref, b3_ref,
                 w4_ref, b4_ref,
                 o_ref):
    # x_ref: [state_size, TILE_B]  (features on sublanes, batch on lanes)
    # wN_ref: [out, in]   bN_ref: [out, 1] (f32, broadcast over the lane axis)
    cdt = w1_ref.dtype  # matmul input dtype (f32, or bf16 on v6e/v7x)

    # Layer 1: Linear(state_size, 20) + ReLU
    h = jnp.dot(w1_ref[...], x_ref[...].astype(cdt),
                preferred_element_type=jnp.float32) + b1_ref[...]
    h = jnp.maximum(h, 0.0)
    # Layer 2: Linear(20, 30) + ReLU
    h = jnp.dot(w2_ref[...], h.astype(cdt),
                preferred_element_type=jnp.float32) + b2_ref[...]
    h = jnp.maximum(h, 0.0)
    # Layer 3: Linear(30, 30) + ReLU
    h = jnp.dot(w3_ref[...], h.astype(cdt),
                preferred_element_type=jnp.float32) + b3_ref[...]
    h = jnp.maximum(h, 0.0)
    # Layer 4: Linear(30, action_size) (no activation)
    out = jnp.dot(w4_ref[...], h.astype(cdt),
                  preferred_element_type=jnp.float32) + b4_ref[...]
    o_ref[...] = out.astype(o_ref.dtype)


def qnetwork_forward(x, params, *, tile_b=512):
    """x: [B, state_size]; params: (w1,b1,...,w4,b4) with wN [out,in], bN [out,1]."""
    w1, b1, w2, b2, w3, b3, w4, b4 = params
    B, state_size = x.shape
    action_size = w4.shape[0]

    # Batch lives on the lane axis inside the kernel -> tile must be a
    # multiple of 128.  Cap the tile at the (padded) batch for tiny batches.
    tile = _round_up(max(128, min(tile_b, _round_up(B, 128))), 128)
    b_pad = _round_up(B, tile)
    grid = b_pad // tile

    # Feature-major input slab [state_size, B_pad] (layout plumbing only).
    xt = jnp.pad(x, ((0, b_pad - B), (0, 0))).T

    flops = 2 * b_pad * (state_size * H1 + H1 * H2 + H2 * H3 + H3 * action_size)
    bytes_accessed = (xt.size * xt.dtype.itemsize
                      + b_pad * action_size * 4
                      + sum(int(p.size) * p.dtype.itemsize for p in params))
    cost = pl.CostEstimate(flops=flops, transcendentals=0,
                           bytes_accessed=bytes_accessed)

    def resident(arr):
        # Full-array block, same block for every grid step -> stays in VMEM.
        return pl.BlockSpec(arr.shape, lambda i: (0, 0))

    out_t = pl.pallas_call(
        _qnet_kernel,
        out_shape=jax.ShapeDtypeStruct((action_size, b_pad), jnp.float32),
        grid=(grid,),
        in_specs=[
            pl.BlockSpec((state_size, tile), lambda i: (0, i)),  # x tile
            resident(w1), resident(b1),
            resident(w2), resident(b2),
            resident(w3), resident(b3),
            resident(w4), resident(b4),
        ],
        out_specs=pl.BlockSpec((action_size, tile), lambda i: (0, i)),
        compiler_params=pltpu.CompilerParams(
            dimension_semantics=("parallel",)),  # shard batch across TCs on v7x
        cost_estimate=cost,
    )(xt, w1, b1, w2, b2, w3, b3, w4, b4)

    # Back to the PyTorch-facing [B, action_size] layout.
    return out_t.T[:B]


def init_params(key, state_size, action_size, weight_dtype=jnp.float32):
    """PyTorch-Linear-like uniform fan-in init, stored feature-major:
    weights [out, in], biases [out, 1] (biases kept f32)."""
    dims = [(state_size, H1), (H1, H2), (H2, H3), (H3, action_size)]
    params = []
    for fan_in, fan_out in dims:
        key, kw, kb = jax.random.split(key, 3)
        bound = 1.0 / float(fan_in) ** 0.5
        w = jax.random.uniform(kw, (fan_out, fan_in), jnp.float32,
                               minval=-bound, maxval=bound).astype(weight_dtype)
        b = jax.random.uniform(kb, (fan_out, 1), jnp.float32,
                               minval=-bound, maxval=bound)
        params += [w, b]
    return tuple(params)


def _reference_forward(x, params):
    w1, b1, w2, b2, w3, b3, w4, b4 = params
    f32 = jnp.float32
    h = jnp.maximum(x @ w1.astype(f32).T + b1.T, 0.0)
    h = jnp.maximum(h @ w2.astype(f32).T + b2.T, 0.0)
    h = jnp.maximum(h @ w3.astype(f32).T + b3.T, 0.0)
    return h @ w4.astype(f32).T + b4.T


if __name__ == "__main__":
    batch = 2
    state_size = 8
    action_size = 4

    key = jax.random.PRNGKey(0)
    key, kx = jax.random.split(key)
    x = jax.random.normal(kx, (batch, state_size), jnp.float32)
    # f32 weights here (keeps the tight-tolerance check exact); pass
    # weight_dtype=jnp.bfloat16 on v6e/v7x to halve weight/activation bytes.
    params = init_params(key, state_size, action_size, weight_dtype=jnp.float32)

    out = qnetwork_forward(x, params)
    out = jax.block_until_ready(out)

    ref = _reference_forward(x, params)
    assert out.shape == (batch, action_size)
    assert jnp.allclose(out, ref, atol=1e-5, rtol=1e-5)

    print("KERNEL_OK")
</pallas_src>

<mosaic_0001>
module attributes {stable_mosaic.version = 11 : i64} {
  func.func @_qnet_kernel(%arg0: i32, %arg1: memref<8x128xf32, #tpu.memory_space<vmem>>, %arg2: memref<20x8xf32, #tpu.memory_space<vmem>>, %arg3: memref<20x1xf32, #tpu.memory_space<vmem>>, %arg4: memref<30x20xf32, #tpu.memory_space<vmem>>, %arg5: memref<30x1xf32, #tpu.memory_space<vmem>>, %arg6: memref<30x30xf32, #tpu.memory_space<vmem>>, %arg7: memref<30x1xf32, #tpu.memory_space<vmem>>, %arg8: memref<4x30xf32, #tpu.memory_space<vmem>>, %arg9: memref<4x1xf32, #tpu.memory_space<vmem>>, %arg10: memref<4x128xf32, #tpu.memory_space<vmem>>) attributes {dimension_semantics = [#tpu.dimension_semantics<parallel>], iteration_bounds = array<i64: 1>, scalar_prefetch = 0 : i64, scratch_operands = 0 : i64, tpu.core_type = #tpu.core_type<tc>, window_params = [{transform_indices = @transform_0, window_bounds = array<i64: 8, 128>}, {pipeline_mode = #tpu.pipeline_mode<synchronous>, transform_indices = @transform_1, window_bounds = array<i64: 20, 8>}, {pipeline_mode = #tpu.pipeline_mode<synchronous>, transform_indices = @transform_2, window_bounds = array<i64: 20, 1>}, {pipeline_mode = #tpu.pipeline_mode<synchronous>, transform_indices = @transform_3, window_bounds = array<i64: 30, 20>}, {pipeline_mode = #tpu.pipeline_mode<synchronous>, transform_indices = @transform_4, window_bounds = array<i64: 30, 1>}, {pipeline_mode = #tpu.pipeline_mode<synchronous>, transform_indices = @transform_5, window_bounds = array<i64: 30, 30>}, {pipeline_mode = #tpu.pipeline_mode<synchronous>, transform_indices = @transform_6, window_bounds = array<i64: 30, 1>}, {pipeline_mode = #tpu.pipeline_mode<synchronous>, transform_indices = @transform_7, window_bounds = array<i64: 4, 30>}, {pipeline_mode = #tpu.pipeline_mode<synchronous>, transform_indices = @transform_8, window_bounds = array<i64: 4, 1>}, {transform_indices = @transform_9, window_bounds = array<i64: 4, 128>}]} {
    %c0 = arith.constant 0 : index
    %c0_0 = arith.constant 0 : index
    %0 = vector.load %arg2[%c0, %c0_0] : memref<20x8xf32, #tpu.memory_space<vmem>>, vector<20x8xf32>
    %c0_1 = arith.constant 0 : index
    %c0_2 = arith.constant 0 : index
    %1 = vector.load %arg1[%c0_1, %c0_2] : memref<8x128xf32, #tpu.memory_space<vmem>>, vector<8x128xf32>
    %cst = arith.constant dense<0.000000e+00> : vector<20x128xf32>
    %2 = tpu.matmul %0, %1, %cst {dimension_numbers = #tpu.dot_dimension_numbers<[1], [0], [0], [1], [0, 0, 1, 1], [], []>} : vector<20x8xf32>, vector<8x128xf32>, vector<20x128xf32> -> vector<20x128xf32>
    %c0_3 = arith.constant 0 : index
    %c0_4 = arith.constant 0 : index
    %3 = vector.load %arg3[%c0_3, %c0_4] : memref<20x1xf32, #tpu.memory_space<vmem>>, vector<20x1xf32>
    %4 = vector.broadcast %3 : vector<20x1xf32> to vector<20x128xf32>
    %5 = arith.addf %2, %4 : vector<20x128xf32>
    %cst_5 = arith.constant 0.000000e+00 : f32
    %6 = vector.broadcast %cst_5 : f32 to vector<20x128xf32>
    %7 = arith.maximumf %5, %6 : vector<20x128xf32>
    %c0_6 = arith.constant 0 : index
    %c0_7 = arith.constant 0 : index
    %8 = vector.load %arg4[%c0_6, %c0_7] : memref<30x20xf32, #tpu.memory_space<vmem>>, vector<30x20xf32>
    %cst_8 = arith.constant dense<0.000000e+00> : vector<30x128xf32>
    %9 = tpu.matmul %8, %7, %cst_8 {dimension_numbers = #tpu.dot_dimension_numbers<[1], [0], [0], [1], [0, 0, 1, 1], [], []>} : vector<30x20xf32>, vector<20x128xf32>, vector<30x128xf32> -> vector<30x128xf32>
    %c0_9 = arith.constant 0 : index
    %c0_10 = arith.constant 0 : index
    %10 = vector.load %arg5[%c0_9, %c0_10] : memref<30x1xf32, #tpu.memory_space<vmem>>, vector<30x1xf32>
    %11 = vector.broadcast %10 : vector<30x1xf32> to vector<30x128xf32>
    %12 = arith.addf %9, %11 : vector<30x128xf32>
    %cst_11 = arith.constant 0.000000e+00 : f32
    %13 = vector.broadcast %cst_11 : f32 to vector<30x128xf32>
    %14 = arith.maximumf %12, %13 : vector<30x128xf32>
    %c0_12 = arith.constant 0 : index
    %c0_13 = arith.constant 0 : index
    %15 = vector.load %arg6[%c0_12, %c0_13] : memref<30x30xf32, #tpu.memory_space<vmem>>, vector<30x30xf32>
    %cst_14 = arith.constant dense<0.000000e+00> : vector<30x128xf32>
    %16 = tpu.matmul %15, %14, %cst_14 {dimension_numbers = #tpu.dot_dimension_numbers<[1], [0], [0], [1], [0, 0, 1, 1], [], []>} : vector<30x30xf32>, vector<30x128xf32>, vector<30x128xf32> -> vector<30x128xf32>
    %c0_15 = arith.constant 0 : index
    %c0_16 = arith.constant 0 : index
    %17 = vector.load %arg7[%c0_15, %c0_16] : memref<30x1xf32, #tpu.memory_space<vmem>>, vector<30x1xf32>
    %18 = vector.broadcast %17 : vector<30x1xf32> to vector<30x128xf32>
    %19 = arith.addf %16, %18 : vector<30x128xf32>
    %cst_17 = arith.constant 0.000000e+00 : f32
    %20 = vector.broadcast %cst_17 : f32 to vector<30x128xf32>
    %21 = arith.maximumf %19, %20 : vector<30x128xf32>
    %c0_18 = arith.constant 0 : index
    %c0_19 = arith.constant 0 : index
    %22 = vector.load %arg8[%c0_18, %c0_19] : memref<4x30xf32, #tpu.memory_space<vmem>>, vector<4x30xf32>
    %cst_20 = arith.constant dense<0.000000e+00> : vector<4x128xf32>
    %23 = tpu.matmul %22, %21, %cst_20 {dimension_numbers = #tpu.dot_dimension_numbers<[1], [0], [0], [1], [0, 0, 1, 1], [], []>} : vector<4x30xf32>, vector<30x128xf32>, vector<4x128xf32> -> vector<4x128xf32>
    %c0_21 = arith.constant 0 : index
    %c0_22 = arith.constant 0 : index
    %24 = vector.load %arg9[%c0_21, %c0_22] : memref<4x1xf32, #tpu.memory_space<vmem>>, vector<4x1xf32>
    %25 = vector.broadcast %24 : vector<4x1xf32> to vector<4x128xf32>
    %26 = arith.addf %23, %25 : vector<4x128xf32>
    %c0_23 = arith.constant 0 : index
    %c0_24 = arith.constant 0 : index
    %27 = vector.load %arg10[%c0_23, %c0_24] : memref<4x128xf32, #tpu.memory_space<vmem>>, vector<4x128xf32>
    tpu.vector_store %arg10[%c0_23, %c0_24], %26 {strides = array<i32>} : memref<4x128xf32, #tpu.memory_space<vmem>>, vector<4x128xf32>,
    return
  }
  func.func @transform_0(%arg0: i32) -> (i32, i32) {
    %c0_i32 = arith.constant 0 : i32
    %c0_i32_0 = arith.constant 0 : i32
    return %c0_i32, %arg0 : i32, i32
  }
  func.func @transform_1(%arg0: i32) -> (i32, i32) {
    %c0_i32 = arith.constant 0 : i32
    %c0_i32_0 = arith.constant 0 : i32
    %c0_i32_1 = arith.constant 0 : i32
    return %c0_i32, %c0_i32_0 : i32, i32
  }
  func.func @transform_2(%arg0: i32) -> (i32, i32) {
    %c0_i32 = arith.constant 0 : i32
    %c0_i32_0 = arith.constant 0 : i32
    %c0_i32_1 = arith.constant 0 : i32
    return %c0_i32, %c0_i32_0 : i32, i32
  }
  func.func @transform_3(%arg0: i32) -> (i32, i32) {
    %c0_i32 = arith.constant 0 : i32
    %c0_i32_0 = arith.constant 0 : i32
    %c0_i32_1 = arith.constant 0 : i32
    return %c0_i32, %c0_i32_0 : i32, i32
  }
  func.func @transform_4(%arg0: i32) -> (i32, i32) {
    %c0_i32 = arith.constant 0 : i32
    %c0_i32_0 = arith.constant 0 : i32
    %c0_i32_1 = arith.constant 0 : i32
    return %c0_i32, %c0_i32_0 : i32, i32
  }
  func.func @transform_5(%arg0: i32) -> (i32, i32) {
    %c0_i32 = arith.constant 0 : i32
    %c0_i32_0 = arith.constant 0 : i32
    %c0_i32_1 = arith.constant 0 : i32
    return %c0_i32, %c0_i32_0 : i32, i32
  }
  func.func @transform_6(%arg0: i32) -> (i32, i32) {
    %c0_i32 = arith.constant 0 : i32
    %c0_i32_0 = arith.constant 0 : i32
    %c0_i32_1 = arith.constant 0 : i32
    return %c0_i32, %c0_i32_0 : i32, i32
  }
  func.func @transform_7(%arg0: i32) -> (i32, i32) {
    %c0_i32 = arith.constant 0 : i32
    %c0_i32_0 = arith.constant 0 : i32
    %c0_i32_1 = arith.constant 0 : i32
    return %c0_i32, %c0_i32_0 : i32, i32
  }
  func.func @transform_8(%arg0: i32) -> (i32, i32) {
    %c0_i32 = arith.constant 0 : i32
    %c0_i32_0 = arith.constant 0 : i32
    %c0_i32_1 = arith.constant 0 : i32
    return %c0_i32, %c0_i32_0 : i32, i32
  }
  func.func @transform_9(%arg0: i32) -> (i32, i32) {
    %c0_i32 = arith.constant 0 : i32
    %c0_i32_0 = arith.constant 0 : i32
    return %c0_i32, %arg0 : i32, i32
  }
}

</mosaic_0001>

<llo_original>
// kernel: tpu_custom_call.1
$region0: #{tpu_custom_call.1}
  #allocation0 [shape = 'u32[]', space=smem, size = 0x4, offset = 0x4, fixed_abs, tag = 'smem constant byte address 0x4 - core index']
  #allocation1 [shape = 'u32[144,128]{1,0:T(1,128)}', space=vmem, size = 0x12000, scoped, tag = 'internal scratch']
  %s0 = inlined_call_operand.vmem [shape: f32[8,128], index: 0, kind: input, shape index: {}]
  %s1 = inlined_call_operand.vmem [shape: f32[20,8], index: 1, kind: input, shape index: {}]
  %s2 = inlined_call_operand.vmem [shape: f32[20,1], index: 2, kind: input, shape index: {}]
  %s3 = inlined_call_operand.vmem [shape: f32[30,20], index: 3, kind: input, shape index: {}]
  %s4 = inlined_call_operand.vmem [shape: f32[30,1], index: 4, kind: input, shape index: {}]
  %s5 = inlined_call_operand.vmem [shape: f32[30,30], index: 5, kind: input, shape index: {}]
  %s6 = inlined_call_operand.vmem [shape: f32[30,1], index: 6, kind: input, shape index: {}]
  %s7 = inlined_call_operand.vmem [shape: f32[4,30], index: 7, kind: input, shape index: {}]
  %s8 = inlined_call_operand.vmem [shape: f32[4,1], index: 8, kind: input, shape index: {}]
  %s9 = inlined_call_operand.hbm [shape: f32[4,128], index: 9, kind: output, shape index: {}]
  %s10 = sld [smem:[#allocation0]]
  $region46: #{tpu_custom_call.1} parent=0
    _
  %s12 = ssub.s32 1, %s10
  %s13 = scalar_select 0, %s12, %s10
  $region1: #{tpu_custom_call.1} parent=0
    #allocation2 [shape = 'u8[2048]{0}', space=vmem, size = 0x800, scoped, tag = 'output window, operand 0, single buffered']
    #allocation3 [shape = 's32[1]{0}', space=sflag, size = 0x4, scoped, tag = 'scoped memory for tpu_custom_call.1']
    %14 = vsyncpa [#allocation3], 0
    // Predicated region
    $region2: #{tpu_custom_call.1} parent=1 // pred_check
      _
    $region3: #{tpu_custom_call.1} parent=1 // pred_check_branch
      %16 = sbr.rel (0) target = $region5
    $region4: #{tpu_custom_call.1} parent=1 // pred_region
      _
    $region5: #{tpu_custom_call.1} parent=1 // pred_fallthru
      _
    // Predicated region
    $region6: #{tpu_custom_call.1} parent=1 // pred_check
      _
    $region7: #{tpu_custom_call.1} parent=1 // pred_check_branch
      %18 = sbr.rel (0) target = $region9
    $region8: #{tpu_custom_call.1} parent=1 // pred_region
      _
    $region9: #{tpu_custom_call.1} parent=1 // pred_fallthru
      _
    // Predicated region
    $region10: #{tpu_custom_call.1} parent=1 // pred_check
      _
    $region11: #{tpu_custom_call.1} parent=1 // pred_check_branch
      %20 = sbr.rel (0) target = $region13
    $region12: #{tpu_custom_call.1} parent=1 // pred_region
      _
    $region13: #{tpu_custom_call.1} parent=1 // pred_fallthru
      _
    // Predicated region
    $region14: #{tpu_custom_call.1} parent=1 // pred_check
      _
    $region15: #{tpu_custom_call.1} parent=1 // pred_check_branch
      %22 = sbr.rel (0) target = $region17
    $region16: #{tpu_custom_call.1} parent=1 // pred_region
      _
    $region17: #{tpu_custom_call.1} parent=1 // pred_fallthru
      _
    // Predicated region
    $region18: #{tpu_custom_call.1} parent=1 // pred_check
      _
    $region19: #{tpu_custom_call.1} parent=1 // pred_check_branch
      %24 = sbr.rel (0) target = $region21
    $region20: #{tpu_custom_call.1} parent=1 // pred_region
      _
    $region21: #{tpu_custom_call.1} parent=1 // pred_fallthru
      _
    // Predicated region
    $region22: #{tpu_custom_call.1} parent=1 // pred_check
      _
    $region23: #{tpu_custom_call.1} parent=1 // pred_check_branch
      %26 = sbr.rel (0) target = $region25
    $region24: #{tpu_custom_call.1} parent=1 // pred_region
      _
    $region25: #{tpu_custom_call.1} parent=1 // pred_fallthru
      _
    // Predicated region
    $region26: #{tpu_custom_call.1} parent=1 // pred_check
      _
    $region27: #{tpu_custom_call.1} parent=1 // pred_check_branch
      %28 = sbr.rel (0) target = $region29
    $region28: #{tpu_custom_call.1} parent=1 // pred_region
      _
    $region29: #{tpu_custom_call.1} parent=1 // pred_fallthru
      _
    // Predicated region
    $region30: #{tpu_custom_call.1} parent=1 // pred_check
      _
    $region31: #{tpu_custom_call.1} parent=1 // pred_check_branch
      %30 = sbr.rel (0) target = $region33
    $region32: #{tpu_custom_call.1} parent=1 // pred_region
      _
    $region33: #{tpu_custom_call.1} parent=1 // pred_fallthru
      _
    // Predicated region
    $region34: #{tpu_custom_call.1} parent=1 // pred_check
      _
    $region35: #{tpu_custom_call.1} parent=1 // pred_check_branch
      %32 = sbr.rel (0) target = $region37
    $region36: #{tpu_custom_call.1} parent=1 // pred_region
      _
    $region37: #{tpu_custom_call.1} parent=1 // pred_fallthru
      _
    %v33 = vld [vmem:[%s1] sm:$0xff]
    %v34 = vld [vmem:[%s1 + $0x8] sm:$0xff]
    %v35 = vld [vmem:[%s1 + $0x10] sm:$0xf]
    %v36 = vld [vmem:[%s0] sm:$0xff]
    %v37 = vld [vmem:[%s2] sm:$0xff]
    %v38 = vld [vmem:[%s2 + $0x8] sm:$0xff]
    %v39 = vld [vmem:[%s2 + $0x10] sm:$0xf]
    %41 = vset.pattern.permute.xlu0 0
    %42 = vperm.xlu0 %41, %v37
    %v43 = vpop.permute.xlu0 %42
    %46 = vset.pattern.permute.xlu0 0
    %47 = vperm.xlu0 %46, %v38
    %v48 = vpop.permute.xlu0 %47
    %51 = vset.pattern.permute.xlu0 0
    %52 = vperm.xlu0 %51, %v39
    %v53 = vpop.permute.xlu0 %52
    %vm55 = vcmask 64512
    %v57 = vsel %vm55, %v33, 0
    %v60 = vsel %vm55, %v34, 0
    %v63 = vsel %vm55, %v35, 0
    %65 = vmatprep.subr.mxu0 0.0
    %66 = vmatpush1.msra.mxu0 %v36
    %67 = vmatprep.subr.mxu0 0.0
    %68 = vmatpush1.msra.mxu0 0.0
    %69 = vmatprep.subr.mxu0 0.0
    %70 = vmatpush1.msra.mxu0 0.0
    %71 = vmatprep.subr.mxu0 0.0
    %72 = vmatpush1.msra.mxu0 0.0
    %73 = vmatprep.subr.mxu0 0.0
    %74 = vmatpush1.msra.mxu0 0.0
    %75 = vmatprep.subr.mxu0 0.0
    %76 = vmatpush1.msra.mxu0 0.0
    %77 = vmatprep.subr.mxu0 0.0
    %78 = vmatpush1.msra.mxu0 0.0
    %79 = vmatprep.subr.mxu0 0.0
    %80 = vmatpush1.msra.mxu0 0.0
    %81 = vmatprep.subr.mxu0 0.0
    %82 = vmatpush1.msra.mxu0 0.0
    %83 = vmatprep.subr.mxu0 0.0
    %84 = vmatpush1.msra.mxu0 0.0
    %85 = vmatprep.subr.mxu0 0.0
    %86 = vmatpush1.msra.mxu0 0.0
    %87 = vmatprep.subr.mxu0 0.0
    %88 = vmatpush1.msra.mxu0 0.0
    %89 = vmatprep.subr.mxu0 0.0
    %90 = vmatpush1.msra.mxu0 0.0
    %91 = vmatprep.subr.mxu0 0.0
    %92 = vmatpush1.msra.mxu0 0.0
    %93 = vmatprep.subr.mxu0 0.0
    %94 = vmatpush1.msra.mxu0 0.0
    %95 = vmatprep.subr.mxu0 0.0
    %96 = vmatpush1.msra.mxu0 0.0
    %97 = vmatprep.subr.mxu0 0.0
    %98 = vmatpush1.msra.mxu0 0.0
    %99 = vmatprep.subr.mxu0 0.0
    %100 = vmatpush1.msra.mxu0 0.0
    %101 = vmatprep.subr.mxu0 0.0
    %102 = vmatpush1.msra.mxu0 0.0
    %103 = vmatprep.subr.mxu0 0.0
    %104 = vmatpush1.msra.mxu0 0.0
    %105 = vmatprep.subr.mxu0 0.0
    %106 = vmatpush1.msra.mxu0 0.0
    %107 = vmatprep.subr.mxu0 0.0
    %108 = vmatpush1.msra.mxu0 0.0
    %109 = vmatprep.subr.mxu0 0.0
    %110 = vmatpush1.msra.mxu0 0.0
    %111 = vmatprep.subr.mxu0 0.0
    %112 = vmatpush1.msra.mxu0 0.0
    %113 = vmatprep.subr.mxu0 0.0
    %114 = vmatpush1.msra.mxu0 0.0
    %115 = vmatprep.subr.mxu0 0.0
    %116 = vmatpush1.msra.mxu0 0.0
    %117 = vmatprep.subr.mxu0 0.0
    %118 = vmatpush1.msra.mxu0 0.0
    %119 = vmatprep.subr.mxu0 0.0
    %120 = vmatpush1.msra.mxu0 0.0
    %121 = vmatprep.subr.mxu0 0.0
    %122 = vmatpush1.msra.mxu0 0.0
    %123 = vmatprep.subr.mxu0 0.0
    %124 = vmatpush1.msra.mxu0 0.0
    %125 = vmatprep.subr.mxu0 0.0
    %126 = vmatpush1.msra.mxu0 0.0
    %127 = vmatprep.subr.mxu0 0.0
    %128 = vmatpush1.msra.mxu0 0.0
    %129 = vmatprep.mubr.f32.mxu0 0.0
    %130 = vmatmul.mubr.f32.gmra.mrb[0].mxu0 %v57
    %v131 = vpop.f32.mrb[0].mxu0
    %v132 = vadd.f32 %v43, %v131
    %v133 = vpop.f32.mrb[0].mxu0
    %134 = vmatprep.mubr.f32.mxu0 0.0
    %135 = vmatmul.mubr.f32.gmra.mrb[0].mxu0 %v60
    %v136 = vpop.f32.mrb[0].mxu0
    %v137 = vadd.f32 %v48, %v136
    %v138 = vpop.f32.mrb[0].mxu0
    %139 = vmatprep.mubr.f32.mxu0 0.0
    %140 = vmatmul.mubr.f32.gmra.mrb[0].mxu0 %v63
    %v141 = vpop.f32.mrb[0].mxu0
    %v142 = vadd.f32 %v53, %v141
    %v143 = vpop.f32.mrb[0].mxu0
    %144 = vdwg.mxu0
    %v145 = vmax.f32 %v132, 0.0
    %v146 = vmax.f32 %v137, 0.0
    %v147 = vmax.f32 %v142, 0.0
    %v148 = vld [vmem:[%s3] sm:$0xff]
    %v149 = vld [vmem:[%s3 + $0x8] sm:$0xff]
    %v150 = vld [vmem:[%s3 + $0x10] sm:$0xff]
    %v151 = vld [vmem:[%s3 + $0x18] sm:$0x3f]
    %v152 = vld [vmem:[%s4] sm:$0xff]
    %v153 = vld [vmem:[%s4 + $0x8] sm:$0xff]
    %v154 = vld [vmem:[%s4 + $0x10] sm:$0xff]
    %v155 = vld [vmem:[%s4 + $0x18] sm:$0x3f]
    %157 = vset.pattern.permute.xlu0 0
    %158 = vperm.xlu0 %157, %v152
    %v159 = vpop.permute.xlu0 %158
    %162 = vset.pattern.permute.xlu0 0
    %163 = vperm.xlu0 %162, %v153
    %v164 = vpop.permute.xlu0 %163
    %167 = vset.pattern.permute.xlu0 0
    %168 = vperm.xlu0 %167, %v154
    %v169 = vpop.permute.xlu0 %168
    %172 = vset.pattern.permute.xlu0 0
    %173 = vperm.xlu0 %172, %v155
    %v174 = vpop.permute.xlu0 %173
    %vm176 = vcmask 162816
    %v178 = vsel %vm176, %v148, 0
    %v181 = vsel %vm176, %v149, 0
    %v184 = vsel %vm176, %v150, 0
    %v187 = vsel %vm176, %v151, 0
    %vm189 = vcmask 1043456
    %v191 = vsel %vm189, %v147, 0
    %193 = vmatprep.subr.mxu0 0.0
    %194 = vmatpush1.msra.mxu0 %v145
    %195 = vmatprep.subr.mxu0 0.0
    %196 = vmatpush1.msra.mxu0 %v146
    %197 = vmatprep.subr.mxu0 0.0
    %198 = vmatpush1.msra.mxu0 %v191
    %199 = vmatprep.subr.mxu0 0.0
    %200 = vmatpush1.msra.mxu0 0.0
    %201 = vmatprep.subr.mxu0 0.0
    %202 = vmatpush1.msra.mxu0 0.0
    %203 = vmatprep.subr.mxu0 0.0
    %204 = vmatpush1.msra.mxu0 0.0
    %205 = vmatprep.subr.mxu0 0.0
    %206 = vmatpush1.msra.mxu0 0.0
    %207 = vmatprep.subr.mxu0 0.0
    %208 = vmatpush1.msra.mxu0 0.0
    %209 = vmatprep.subr.mxu0 0.0
    %210 = vmatpush1.msra.mxu0 0.0
    %211 = vmatprep.subr.mxu0 0.0
    %212 = vmatpush1.msra.mxu0 0.0
    %213 = vmatprep.subr.mxu0 0.0
    %214 = vmatpush1.msra.mxu0 0.0
    %215 = vmatprep.subr.mxu0 0.0
    %216 = vmatpush1.msra.mxu0 0.0
    %217 = vmatprep.subr.mxu0 0.0
    %218 = vmatpush1.msra.mxu0 0.0
    %219 = vmatprep.subr.mxu0 0.0
    %220 = vmatpush1.msra.mxu0 0.0
    %221 = vmatprep.subr.mxu0 0.0
    %222 = vmatpush1.msra.mxu0 0.0
    %223 = vmatprep.subr.mxu0 0.0
    %224 = vmatpush1.msra.mxu0 0.0
    %225 = vmatprep.subr.mxu0 0.0
    %226 = vmatpush1.msra.mxu0 0.0
    %227 = vmatprep.subr.mxu0 0.0
    %228 = vmatpush1.msra.mxu0 0.0
    %229 = vmatprep.subr.mxu0 0.0
    %230 = vmatpush1.msra.mxu0 0.0
    %231 = vmatprep.subr.mxu0 0.0
    %232 = vmatpush1.msra.mxu0 0.0
    %233 = vmatprep.subr.mxu0 0.0
    %234 = vmatpush1.msra.mxu0 0.0
    %235 = vmatprep.subr.mxu0 0.0
    %236 = vmatpush1.msra.mxu0 0.0
    %237 = vmatprep.subr.mxu0 0.0
    %238 = vmatpush1.msra.mxu0 0.0
    %239 = vmatprep.subr.mxu0 0.0
    %240 = vmatpush1.msra.mxu0 0.0
    %241 = vmatprep.subr.mxu0 0.0
    %242 = vmatpush1.msra.mxu0 0.0
    %243 = vmatprep.subr.mxu0 0.0
    %244 = vmatpush1.msra.mxu0 0.0
    %245 = vmatprep.subr.mxu0 0.0
    %246 = vmatpush1.msra.mxu0 0.0
    %247 = vmatprep.subr.mxu0 0.0
    %248 = vmatpush1.msra.mxu0 0.0
    %249 = vmatprep.subr.mxu0 0.0
    %250 = vmatpush1.msra.mxu0 0.0
    %251 = vmatprep.subr.mxu0 0.0
    %252 = vmatpush1.msra.mxu0 0.0
    %253 = vmatprep.subr.mxu0 0.0
    %254 = vmatpush1.msra.mxu0 0.0
    %255 = vmatprep.subr.mxu0 0.0
    %256 = vmatpush1.msra.mxu0 0.0
    %257 = vmatprep.mubr.f32.mxu0 0.0
    %258 = vmatmul.mubr.f32.gmra.mrb[0].mxu0 %v178
    %v259 = vpop.f32.mrb[0].mxu0
    %v260 = vadd.f32 %v159, %v259
    %v261 = vpop.f32.mrb[0].mxu0
    %262 = vmatprep.mubr.f32.mxu0 0.0
    %263 = vmatmul.mubr.f32.gmra.mrb[0].mxu0 %v181
    %v264 = vpop.f32.mrb[0].mxu0
    %v265 = vadd.f32 %v164, %v264
    %v266 = vpop.f32.mrb[0].mxu0
    %267 = vmatprep.mubr.f32.mxu0 0.0
    %268 = vmatmul.mubr.f32.gmra.mrb[0].mxu0 %v184
    %v269 = vpop.f32.mrb[0].mxu0
    %v270 = vadd.f32 %v169, %v269
    %v271 = vpop.f32.mrb[0].mxu0
    %272 = vmatprep.mubr.f32.mxu0 0.0
    %273 = vmatmul.mubr.f32.gmra.mrb[0].mxu0 %v187
    %v274 = vpop.f32.mrb[0].mxu0
    %v275 = vadd.f32 %v174, %v274
    %v276 = vpop.f32.mrb[0].mxu0
    %277 = vdwg.mxu0
    %v278 = vmax.f32 %v260, 0.0
    %v279 = vmax.f32 %v265, 0.0
    %v280 = vmax.f32 %v270, 0.0
    %v281 = vmax.f32 %v275, 0.0
    %v282 = vld [vmem:[%s5] sm:$0xff]
    %v283 = vld [vmem:[%s5 + $0x8] sm:$0xff]
    %v284 = vld [vmem:[%s5 + $0x10] sm:$0xff]
    %v285 = vld [vmem:[%s5 + $0x18] sm:$0x3f]
    %v286 = vld [vmem:[%s6] sm:$0xff]
    %v287 = vld [vmem:[%s6 + $0x8] sm:$0xff]
    %v288 = vld [vmem:[%s6 + $0x10] sm:$0xff]
    %v289 = vld [vmem:[%s6 + $0x18] sm:$0x3f]
    %291 = vset.pattern.permute.xlu0 0
    %292 = vperm.xlu0 %291, %v286
    %v293 = vpop.permute.xlu0 %292
    %296 = vset.pattern.permute.xlu0 0
    %297 = vperm.xlu0 %296, %v287
    %v298 = vpop.permute.xlu0 %297
    %301 = vset.pattern.permute.xlu0 0
    %302 = vperm.xlu0 %301, %v288
    %v303 = vpop.permute.xlu0 %302
    %306 = vset.pattern.permute.xlu0 0
    %307 = vperm.xlu0 %306, %v289
    %v308 = vpop.permute.xlu0 %307
    %vm310 = vcmask 244736
    %v312 = vsel %vm310, %v282, 0
    %v315 = vsel %vm310, %v283, 0
    %v318 = vsel %vm310, %v284, 0
    %v321 = vsel %vm310, %v285, 0
    %vm323 = vcmask 1045504
    %v325 = vsel %vm323, %v281, 0
    %327 = vmatprep.subr.mxu0 0.0
    %328 = vmatpush1.msra.mxu0 %v278
    %329 = vmatprep.subr.mxu0 0.0
    %330 = vmatpush1.msra.mxu0 %v279
    %331 = vmatprep.subr.mxu0 0.0
    %332 = vmatpush1.msra.mxu0 %v280
    %333 = vmatprep.subr.mxu0 0.0
    %334 = vmatpush1.msra.mxu0 %v325
    %335 = vmatprep.subr.mxu0 0.0
    %336 = vmatpush1.msra.mxu0 0.0
    %337 = vmatprep.subr.mxu0 0.0
    %338 = vmatpush1.msra.mxu0 0.0
    %339 = vmatprep.subr.mxu0 0.0
    %340 = vmatpush1.msra.mxu0 0.0
    %341 = vmatprep.subr.mxu0 0.0
    %342 = vmatpush1.msra.mxu0 0.0
    %343 = vmatprep.subr.mxu0 0.0
    %344 = vmatpush1.msra.mxu0 0.0
    %345 = vmatprep.subr.mxu0 0.0
    %346 = vmatpush1.msra.mxu0 0.0
    %347 = vmatprep.subr.mxu0 0.0
    %348 = vmatpush1.msra.mxu0 0.0
    %349 = vmatprep.subr.mxu0 0.0
    %350 = vmatpush1.msra.mxu0 0.0
    %351 = vmatprep.subr.mxu0 0.0
    %352 = vmatpush1.msra.mxu0 0.0
    %353 = vmatprep.subr.mxu0 0.0
    %354 = vmatpush1.msra.mxu0 0.0
    %355 = vmatprep.subr.mxu0 0.0
    %356 = vmatpush1.msra.mxu0 0.0
    %357 = vmatprep.subr.mxu0 0.0
    %358 = vmatpush1.msra.mxu0 0.0
    %359 = vmatprep.subr.mxu0 0.0
    %360 = vmatpush1.msra.mxu0 0.0
    %361 = vmatprep.subr.mxu0 0.0
    %362 = vmatpush1.msra.mxu0 0.0
    %363 = vmatprep.subr.mxu0 0.0
    %364 = vmatpush1.msra.mxu0 0.0
    %365 = vmatprep.subr.mxu0 0.0
    %366 = vmatpush1.msra.mxu0 0.0
    %367 = vmatprep.subr.mxu0 0.0
    %368 = vmatpush1.msra.mxu0 0.0
    %369 = vmatprep.subr.mxu0 0.0
    %370 = vmatpush1.msra.mxu0 0.0
    %371 = vmatprep.subr.mxu0 0.0
    %372 = vmatpush1.msra.mxu0 0.0
    %373 = vmatprep.subr.mxu0 0.0
    %374 = vmatpush1.msra.mxu0 0.0
    %375 = vmatprep.subr.mxu0 0.0
    %376 = vmatpush1.msra.mxu0 0.0
    %377 = vmatprep.subr.mxu0 0.0
    %378 = vmatpush1.msra.mxu0 0.0
    %379 = vmatprep.subr.mxu0 0.0
    %380 = vmatpush1.msra.mxu0 0.0
    %381 = vmatprep.subr.mxu0 0.0
    %382 = vmatpush1.msra.mxu0 0.0
    %383 = vmatprep.subr.mxu0 0.0
    %384 = vmatpush1.msra.mxu0 0.0
    %385 = vmatprep.subr.mxu0 0.0
    %386 = vmatpush1.msra.mxu0 0.0
    %387 = vmatprep.subr.mxu0 0.0
    %388 = vmatpush1.msra.mxu0 0.0
    %389 = vmatprep.subr.mxu0 0.0
    %390 = vmatpush1.msra.mxu0 0.0
    %391 = vmatprep.mubr.f32.mxu0 0.0
    %392 = vmatmul.mubr.f32.gmra.mrb[0].mxu0 %v312
    %v393 = vpop.f32.mrb[0].mxu0
    %v394 = vadd.f32 %v293, %v393
    %v395 = vpop.f32.mrb[0].mxu0
    %396 = vmatprep.mubr.f32.mxu0 0.0
    %397 = vmatmul.mubr.f32.gmra.mrb[0].mxu0 %v315
    %v398 = vpop.f32.mrb[0].mxu0
    %v399 = vadd.f32 %v298, %v398
    %v400 = vpop.f32.mrb[0].mxu0
    %401 = vmatprep.mubr.f32.mxu0 0.0
    %402 = vmatmul.mubr.f32.gmra.mrb[0].mxu0 %v318
    %v403 = vpop.f32.mrb[0].mxu0
    %v404 = vadd.f32 %v303, %v403
    %v405 = vpop.f32.mrb[0].mxu0
    %406 = vmatprep.mubr.f32.mxu0 0.0
    %407 = vmatmul.mubr.f32.gmra.mrb[0].mxu0 %v321
    %v408 = vpop.f32.mrb[0].mxu0
    %v409 = vadd.f32 %v308, %v408
    %v410 = vpop.f32.mrb[0].mxu0
    %411 = vdwg.mxu0
    %v412 = vmax.f32 %v394, 0.0
    %v413 = vmax.f32 %v399, 0.0
    %v414 = vmax.f32 %v404, 0.0
    %v415 = vmax.f32 %v409, 0.0
    %v416 = vld [vmem:[%s7] sm:$0xf]
    %v417 = vld [vmem:[%s8] sm:$0xf]
    %419 = vset.pattern.permute.xlu0 0
    %420 = vperm.xlu0 %419, %v417
    %v421 = vpop.permute.xlu0 %420
    %v424 = vsel %vm310, %v416, 0
    %v427 = vsel %vm323, %v415, 0
    %429 = vmatprep.subr.mxu0 0.0
    %430 = vmatpush1.msra.mxu0 %v412
    %431 = vmatprep.subr.mxu0 0.0
    %432 = vmatpush1.msra.mxu0 %v413
    %433 = vmatprep.subr.mxu0 0.0
    %434 = vmatpush1.msra.mxu0 %v414
    %435 = vmatprep.subr.mxu0 0.0
    %436 = vmatpush1.msra.mxu0 %v427
    %437 = vmatprep.subr.mxu0 0.0
    %438 = vmatpush1.msra.mxu0 0.0
    %439 = vmatprep.subr.mxu0 0.0
    %440 = vmatpush1.msra.mxu0 0.0
    %441 = vmatprep.subr.mxu0 0.0
    %442 = vmatpush1.msra.mxu0 0.0
    %443 = vmatprep.subr.mxu0 0.0
    %444 = vmatpush1.msra.mxu0 0.0
    %445 = vmatprep.subr.mxu0 0.0
    %446 = vmatpush1.msra.mxu0 0.0
    %447 = vmatprep.subr.mxu0 0.0
    %448 = vmatpush1.msra.mxu0 0.0
    %449 = vmatprep.subr.mxu0 0.0
    %450 = vmatpush1.msra.mxu0 0.0
    %451 = vmatprep.subr.mxu0 0.0
    %452 = vmatpush1.msra.mxu0 0.0
    %453 = vmatprep.subr.mxu0 0.0
    %454 = vmatpush1.msra.mxu0 0.0
    %455 = vmatprep.subr.mxu0 0.0
    %456 = vmatpush1.msra.mxu0 0.0
    %457 = vmatprep.subr.mxu0 0.0
    %458 = vmatpush1.msra.mxu0 0.0
    %459 = vmatprep.subr.mxu0 0.0
    %460 = vmatpush1.msra.mxu0 0.0
    %461 = vmatprep.subr.mxu0 0.0
    %462 = vmatpush1.msra.mxu0 0.0
    %463 = vmatprep.subr.mxu0 0.0
    %464 = vmatpush1.msra.mxu0 0.0
    %465 = vmatprep.subr.mxu0 0.0
    %466 = vmatpush1.msra.mxu0 0.0
    %467 = vmatprep.subr.mxu0 0.0
    %468 = vmatpush1.msra.mxu0 0.0
    %469 = vmatprep.subr.mxu0 0.0
    %470 = vmatpush1.msra.mxu0 0.0
    %471 = vmatprep.subr.mxu0 0.0
    %472 = vmatpush1.msra.mxu0 0.0
    %473 = vmatprep.subr.mxu0 0.0
    %474 = vmatpush1.msra.mxu0 0.0
    %475 = vmatprep.subr.mxu0 0.0
    %476 = vmatpush1.msra.mxu0 0.0
    %477 = vmatprep.subr.mxu0 0.0
    %478 = vmatpush1.msra.mxu0 0.0
    %479 = vmatprep.subr.mxu0 0.0
    %480 = vmatpush1.msra.mxu0 0.0
    %481 = vmatprep.subr.mxu0 0.0
    %482 = vmatpush1.msra.mxu0 0.0
    %483 = vmatprep.subr.mxu0 0.0
    %484 = vmatpush1.msra.mxu0 0.0
    %485 = vmatprep.subr.mxu0 0.0
    %486 = vmatpush1.msra.mxu0 0.0
    %487 = vmatprep.subr.mxu0 0.0
    %488 = vmatpush1.msra.mxu0 0.0
    %489 = vmatprep.subr.mxu0 0.0
    %490 = vmatpush1.msra.mxu0 0.0
    %491 = vmatprep.subr.mxu0 0.0
    %492 = vmatpush1.msra.mxu0 0.0
    %493 = vmatprep.mubr.f32.mxu0 0.0
    %494 = vmatmul.mubr.f32.gmra.mrb[0].mxu0 %v424
    %v495 = vpop.f32.mrb[0].mxu0
    %v496 = vadd.f32 %v421, %v495
    %v497 = vpop.f32.mrb[0].mxu0
    %498 = vdwg.mxu0
    %499 = vst [vmem:[#allocation2] sm:$0xf] %v496
    // Predicated region
    $region38: #{tpu_custom_call.1} parent=1 // pred_check
      _
    $region39: #{tpu_custom_call.1} parent=1 // pred_check_branch
      %501 = sbr.rel (0) target = $region41
    $region40: #{tpu_custom_call.1} parent=1 // pred_region
      %s503 = ssub.s32 64, 64
      %504 = vsyncadd [#allocation3], %s503
      %s506 = sshll.u32 [#allocation2], 4
      %s507 = int_to_ptr.vmem [resolvable:$true] %s506
      %509 = dma.vmem_to_hbm [thread:$0]  %s507, 64, %s9, [#allocation3]
    $region41: #{tpu_custom_call.1} parent=1 // pred_fallthru
      _
    // Predicated region
    $region42: #{tpu_custom_call.1} parent=1 // pred_check
      _
    $region43: #{tpu_custom_call.1} parent=1 // pred_check_branch
      %511 = sbr.rel (0) target = $region45
    $region44: #{tpu_custom_call.1} parent=1 // pred_region
      %512 = dma.done [#allocation3], 64
    $region45: #{tpu_custom_call.1} parent=1 // pred_fallthru
      _
    %513 = vsyncpa [#allocation3], 1

</llo_original>
